<compile_context>
chip_gen: v6e
topology: v6e:2x2x1
jax: 0.10.0
libtpu: 0.0.40
codegen_flags: <defaults>
</compile_context>

<pallas_src>
import jax
import jax.numpy as jnp
from jax.experimental import pallas as pl
from jax.experimental.pallas import tpu as pltpu

_BLOCK_ELEMS = 2 * 1024 * 1024   # ~8 MiB per block at f32
_ROW_ALIGN = 32                  # covers packed tiles: f32 (8,128), bf16 (16,128), int8/fp8 (32,128)


def _h_swish_kernel(x_ref, o_ref):
    # h_swish(x) = x * relu6(x + 3) / 6 ; compute in f32, cast back to the output dtype.
    x = x_ref[...].astype(jnp.float32)
    y = x * jnp.clip(x + 3.0, 0.0, 6.0) * (1.0 / 6.0)
    o_ref[...] = y.astype(o_ref.dtype)


def _pick_lane(n: int):
    """Largest lane width in {512, 256, 128} dividing n; else 128 (with tail padding)."""
    for lane in (512, 256, 128):
        if n % lane == 0:
            return lane, False
    return 128, True


def h_swish(x: jax.Array) -> jax.Array:
    """Forward pass of the h_swish module, computed in a Pallas TPU kernel."""
    orig_shape = x.shape
    dtype = x.dtype
    n = x.size
    if n == 0:
        return x

    lane, needs_pad = _pick_lane(n)

    flat = x.reshape(-1)
    if needs_pad:
        # Rare fallback (n not a multiple of 128): pad the flat view up to the next
        # lane multiple; h_swish(0) == 0 and the tail is sliced off afterwards.
        padded_n = pl.cdiv(n, lane) * lane
        flat = jnp.pad(flat, (0, padded_n - n))
    else:
        padded_n = n

    rows = padded_n // lane
    x2d = flat.reshape(rows, lane)        # zero-copy view when needs_pad is False

    # Block sizing: big contiguous blocks, 32-row aligned, and always >= 2 grid
    # steps when there is more than one tile's worth of rows (v7x megacore).
    if rows <= _ROW_ALIGN:
        block_rows = rows                 # block == full array dims (valid for any dtype)
    else:
        max_rows = max(_ROW_ALIGN, _BLOCK_ELEMS // lane)
        half = max(_ROW_ALIGN, (rows // 2 // _ROW_ALIGN) * _ROW_ALIGN)
        block_rows = min(max_rows, half)

    grid = (pl.cdiv(rows, block_rows),)   # ragged last block: OOB writes are masked
    spec = pl.BlockSpec((block_rows, lane), lambda i: (i, 0))

    # Double-buffered residency (2 in + 2 out blocks) plus headroom; stays well
    # under v7x's 64 MiB physical VMEM.
    block_bytes = block_rows * lane * jnp.dtype(dtype).itemsize
    vmem_limit = min(40 << 20, max(16 << 20, 4 * block_bytes + (8 << 20)))

    out2d = pl.pallas_call(
        _h_swish_kernel,
        out_shape=jax.ShapeDtypeStruct((rows, lane), dtype),
        grid_spec=pltpu.PrefetchScalarGridSpec(
            num_scalar_prefetch=0,
            grid=grid,
            in_specs=[spec],
            out_specs=spec,
        ),
        compiler_params=pltpu.CompilerParams(
            dimension_semantics=("parallel",),
            vmem_limit_bytes=vmem_limit,
        ),
    )(x2d)

    if needs_pad:
        return out2d.reshape(-1)[:n].reshape(orig_shape)
    return out2d.reshape(orig_shape)


if __name__ == "__main__":
    key = jax.random.PRNGKey(0)
    x = jax.random.normal(key, (2, 4, 16, 16), dtype=jnp.float32)  # NCHW

    y = jax.block_until_ready(h_swish(x))

    # Pure-JAX reference: x * relu6(x + 3) / 6
    y_ref = x * jnp.clip(x + 3.0, 0.0, 6.0) / 6.0

    assert y.shape == x.shape and y.dtype == x.dtype
    assert bool(jnp.allclose(y, y_ref, atol=1e-6, rtol=1e-6))
    print("KERNEL_OK")
</pallas_src>

<mosaic_0001>
module attributes {stable_mosaic.version = 11 : i64} {
  func.func @_h_swish_kernel(%arg0: i32, %arg1: memref<4x512xf32, #tpu.memory_space<vmem>>, %arg2: memref<4x512xf32, #tpu.memory_space<vmem>>) attributes {dimension_semantics = [#tpu.dimension_semantics<parallel>], iteration_bounds = array<i64: 1>, scalar_prefetch = 0 : i64, scratch_operands = 0 : i64, tpu.core_type = #tpu.core_type<tc>, window_params = [{transform_indices = @transform_0, window_bounds = array<i64: 4, 512>}, {transform_indices = @transform_1, window_bounds = array<i64: 4, 512>}]} {
    %c0 = arith.constant 0 : index
    %c0_0 = arith.constant 0 : index
    %0 = vector.load %arg1[%c0, %c0_0] : memref<4x512xf32, #tpu.memory_space<vmem>>, vector<4x512xf32>
    %cst = arith.constant 3.000000e+00 : f32
    %1 = vector.broadcast %cst : f32 to vector<4x512xf32>
    %2 = arith.addf %0, %1 : vector<4x512xf32>
    %cst_1 = arith.constant 0.000000e+00 : f32
    %cst_2 = arith.constant 6.000000e+00 : f32
    %3 = vector.broadcast %cst_1 : f32 to vector<4x512xf32>
    %4 = arith.maximumf %3, %2 : vector<4x512xf32>
    %5 = vector.broadcast %cst_2 : f32 to vector<4x512xf32>
    %6 = arith.minimumf %5, %4 : vector<4x512xf32>
    %7 = arith.mulf %0, %6 : vector<4x512xf32>
    %cst_3 = arith.constant 0.166666672 : f32
    %8 = vector.broadcast %cst_3 : f32 to vector<4x512xf32>
    %9 = arith.mulf %7, %8 : vector<4x512xf32>
    %c0_4 = arith.constant 0 : index
    %c0_5 = arith.constant 0 : index
    %10 = vector.load %arg2[%c0_4, %c0_5] : memref<4x512xf32, #tpu.memory_space<vmem>>, vector<4x512xf32>
    tpu.vector_store %arg2[%c0_4, %c0_5], %9 {strides = array<i32>} : memref<4x512xf32, #tpu.memory_space<vmem>>, vector<4x512xf32>,
    return
  }
  func.func @transform_0(%arg0: i32) -> (i32, i32) {
    %c0_i32 = arith.constant 0 : i32
    %c0_i32_0 = arith.constant 0 : i32
    return %arg0, %c0_i32 : i32, i32
  }
  func.func @transform_1(%arg0: i32) -> (i32, i32) {
    %c0_i32 = arith.constant 0 : i32
    %c0_i32_0 = arith.constant 0 : i32
    return %arg0, %c0_i32 : i32, i32
  }
}

</mosaic_0001>

<llo_original>
// kernel: tpu_custom_call.1
$region0: #{tpu_custom_call.1}
  #allocation0 [shape = 'u32[]', space=smem, size = 0x4, offset = 0x4, fixed_abs, tag = 'smem constant byte address 0x4 - core index']
  #allocation1 [shape = 'u32[144,128]{1,0:T(1,128)}', space=vmem, size = 0x12000, scoped, tag = 'internal scratch']
  %s0 = inlined_call_operand.hbm [shape: f32[4,512], index: 0, kind: input, shape index: {}]
  %s1 = inlined_call_operand.hbm [shape: f32[4,512], index: 1, kind: output, shape index: {}]
  %s2 = sld [smem:[#allocation0]]
  $region18: #{tpu_custom_call.1} parent=0
    _
  %s4 = ssub.s32 1, %s2
  %s5 = scalar_select 0, %s4, %s2
  $region1: #{tpu_custom_call.1} parent=0
    #allocation2 [shape = 'u8[8192]{0}', space=vmem, size = 0x2000, scoped, tag = 'input window, operand 0, single buffered']
    #allocation3 [shape = 's32[1]{0}', space=sflag, size = 0x4, scoped, tag = 'scoped memory for tpu_custom_call.1']
    #allocation4 [shape = 's32[1]{0}', space=sflag, size = 0x4, scoped, tag = 'scoped memory for tpu_custom_call.1']
    #allocation5 [shape = 'u8[8192]{0}', space=vmem, size = 0x2000, scoped, tag = 'output window, operand 0, single buffered']
    %6 = vsyncpa [#allocation3], 0
    %7 = vsyncpa [#allocation4], 0
    // Predicated region
    $region2: #{tpu_custom_call.1} parent=1 // pred_check
      _
    $region3: #{tpu_custom_call.1} parent=1 // pred_check_branch
      %9 = sbr.rel (0) target = $region5
    $region4: #{tpu_custom_call.1} parent=1 // pred_region
      %s11 = ssub.s32 256, 256
      %12 = vsyncadd [#allocation3], %s11
      %s14 = sshll.u32 [#allocation2], 4
      %s15 = int_to_ptr.vmem [resolvable:$true] %s14
      %17 = dma.hbm_to_vmem [thread:$0]  %s0, 256, %s15, [#allocation3]
    $region5: #{tpu_custom_call.1} parent=1 // pred_fallthru
      _
    // Predicated region
    $region6: #{tpu_custom_call.1} parent=1 // pred_check
      _
    $region7: #{tpu_custom_call.1} parent=1 // pred_check_branch
      %19 = sbr.rel (0) target = $region9
    $region8: #{tpu_custom_call.1} parent=1 // pred_region
      %20 = dma.done [#allocation3], 256
    $region9: #{tpu_custom_call.1} parent=1 // pred_fallthru
      _
    %v21 = vld [vmem:[#allocation2] sm:$0xff]
    %v22 = vld [vmem:[#allocation2 + $0x8] sm:$0xff]
    %v23 = vadd.f32 %v21, 3.0
    %v24 = vadd.f32 %v22, 3.0
    %v25 = vmax.f32 %v23, 0.0
    %v26 = vmax.f32 %v24, 0.0
    %v27 = vmin.f32 %v25, 6.0
    %v28 = vmin.f32 %v26, 6.0
    %v29 = vmul.f32 %v21, %v27
    %v30 = vmul.f32 %v22, %v28
    %v31 = vmul.f32 %v29, 0.16666667
    %v32 = vmul.f32 %v30, 0.16666667
    %33 = vst [vmem:[#allocation5] sm:$0xff] %v31
    %34 = vst [vmem:[#allocation5 + $0x8] sm:$0xff] %v32
    // Predicated region
    $region10: #{tpu_custom_call.1} parent=1 // pred_check
      _
    $region11: #{tpu_custom_call.1} parent=1 // pred_check_branch
      %36 = sbr.rel (0) target = $region13
    $region12: #{tpu_custom_call.1} parent=1 // pred_region
      %s38 = ssub.s32 256, 256
      %39 = vsyncadd [#allocation4], %s38
      %s41 = sshll.u32 [#allocation5], 4
      %s42 = int_to_ptr.vmem [resolvable:$true] %s41
      %44 = dma.vmem_to_hbm [thread:$0]  %s42, 256, %s1, [#allocation4]
    $region13: #{tpu_custom_call.1} parent=1 // pred_fallthru
      _
    // Predicated region
    $region14: #{tpu_custom_call.1} parent=1 // pred_check
      _
    $region15: #{tpu_custom_call.1} parent=1 // pred_check_branch
      %46 = sbr.rel (0) target = $region17
    $region16: #{tpu_custom_call.1} parent=1 // pred_region
      %47 = dma.done [#allocation4], 256
    $region17: #{tpu_custom_call.1} parent=1 // pred_fallthru
      _
    %48 = vsyncpa [#allocation3], 1
    %49 = vsyncpa [#allocation4], 1

</llo_original>
